<compile_context>
chip_gen: v5e
topology: v5e:2x2
jax: 0.10.0
libtpu: 0.0.40
codegen_flags: <defaults>
</compile_context>

<pallas_src>
import jax
import jax.numpy as jnp
from jax.experimental import pallas as pl
from jax.experimental.pallas import tpu as pltpu

B = 2               # batch
J = 23              # joints / fc heads
C_IN = 9            # input channels per joint
C_HID = 32          # hidden channels
PR = 3 * C_HID + 8  # packed param slab rows (104): 3 x 32-row blocks + bfc row + pad


def _disc_kernel(xt_ref, p_ref, scores_ref, internal_ref):
    # xt_ref:       (B, C_IN, J)   inputs pre-transposed per batch (x^T slices).
    # p_ref:        (PR, J)        packed constants (see prepare_params).
    # scores_ref:   (B, J)         sigmoid per-joint scores.
    # internal_ref: (B, C_HID, J)  hidden^T per batch (NCHW conv output, H squeezed).
    w_t = p_ref[0:C_HID, 0:C_IN]                   # (32, 9)   W_comb^T
    b_brd = p_ref[C_HID:2 * C_HID, :]              # (32, 23)  b_comb pre-broadcast
    wfc_t = p_ref[2 * C_HID:3 * C_HID, :]          # (32, 23)  fc head j weights in lane j
    bfc = p_ref[3 * C_HID:3 * C_HID + 1, :]        # (1, 23)   fc bias row

    logit_rows = []
    for b in range(B):  # B == 2: static unroll is fine at this size (review item 7)
        # Single MXU pass emits hidden^T directly; bias add is a free VPU vadd.
        h_t = jnp.dot(w_t, xt_ref[b], preferred_element_type=jnp.float32) + b_brd  # (32, 23)
        internal_ref[b, :, :] = h_t                                                # 1 store
        # Per-joint fc heads: VPU multiply + sublane (XLU) reduce, MXU stays free.
        logit_rows.append(jnp.sum(h_t * wfc_t, axis=0, keepdims=True))             # (1, 23)

    logits = jnp.concatenate(logit_rows, axis=0) + bfc                             # (2, 23)
    scores_ref[...] = jax.nn.sigmoid(logits)                                       # 1 store


def prepare_params(params):
    """One-time algebraic fusion of the 3 bias-only 1x1 convs + packing into ONE slab."""
    w0, b0, w1, b1, w2, b2, wfc, bfc = params
    w_comb = w0 @ w1 @ w2                               # (9, 32)
    b_comb = (b0 @ w1 + b1) @ w2 + b2                   # (32,)
    slab = jnp.zeros((PR, J), jnp.float32)
    slab = slab.at[0:C_HID, 0:C_IN].set(w_comb.T)                                   # rows 0..31
    slab = slab.at[C_HID:2 * C_HID, :].set(jnp.broadcast_to(b_comb[:, None], (C_HID, J)))
    slab = slab.at[2 * C_HID:3 * C_HID, :].set(wfc.T)                               # rows 64..95
    slab = slab.at[3 * C_HID, :].set(bfc)                                           # row 96
    return slab


def pose_discriminator_forward(inputs, param_slab):
    """inputs: (B, 23, 9) f32.  Returns (scores (B, 23), internal (B, 32, 1, 23))."""
    # Single small transpose so the kernel never transposes hidden (review item 2).
    x_t = jnp.transpose(inputs.astype(jnp.float32), (0, 2, 1))     # (B, 9, 23)

    flops = B * (2 * C_HID * C_IN * J) + B * (3 * C_HID * J)
    bytes_accessed = 4 * (x_t.size + param_slab.size + B * J + B * C_HID * J)

    scores, internal3 = pl.pallas_call(
        _disc_kernel,
        out_shape=(jax.ShapeDtypeStruct((B, J), jnp.float32),
                   jax.ShapeDtypeStruct((B, C_HID, J), jnp.float32)),
        in_specs=[pl.BlockSpec(memory_space=pltpu.MemorySpace.VMEM)] * 2,
        out_specs=(pl.BlockSpec(memory_space=pltpu.MemorySpace.VMEM),
                   pl.BlockSpec(memory_space=pltpu.MemorySpace.VMEM)),
        cost_estimate=pl.CostEstimate(
            flops=flops, transcendentals=B * J, bytes_accessed=bytes_accessed),
    )(x_t, param_slab)

    internal = internal3[:, :, None, :]    # metadata-only reshape to NCHW (B, 32, 1, 23)
    return scores, internal


def init_params(key):
    ks = jax.random.split(key, 8)
    # conv weights stored transposed as (in, out); equivalent to PyTorch (out, in, 1, 1).
    w0 = jax.random.normal(ks[0], (C_IN, C_HID), jnp.float32) * 0.1
    b0 = jax.random.normal(ks[1], (C_HID,), jnp.float32) * 0.1
    w1 = jax.random.normal(ks[2], (C_HID, C_HID), jnp.float32) * 0.1
    b1 = jax.random.normal(ks[3], (C_HID,), jnp.float32) * 0.1
    w2 = jax.random.normal(ks[4], (C_HID, C_HID), jnp.float32) * 0.1
    b2 = jax.random.normal(ks[5], (C_HID,), jnp.float32) * 0.1
    # 23 Linear(32 -> 1) heads stacked: row j is head j's weight.
    wfc = jax.random.normal(ks[6], (J, C_HID), jnp.float32) * 0.1
    bfc = jax.random.normal(ks[7], (J,), jnp.float32) * 0.1
    return (w0, b0, w1, b1, w2, b2, wfc, bfc)


def reference_forward(inputs, params):
    """Plain-JAX reference mirroring the PyTorch eval-mode forward (unfused)."""
    w0, b0, w1, b1, w2, b2, wfc, bfc = params
    h = inputs @ w0 + b0          # (B, J, 32)
    h = h @ w1 + b1
    h = h @ w2 + b2
    scores = jax.nn.sigmoid(jnp.sum(h * wfc[None, :, :], axis=-1) + bfc[None, :])
    internal = h.transpose(0, 2, 1)[:, :, None, :]
    return scores, internal


if __name__ == "__main__":
    # TODO(synk): add_gaussian_noise(inputs, p) only applies in training mode and is
    # not defined in the module source; eval-mode forward is implemented.
    key = jax.random.PRNGKey(0)
    k_in, k_par = jax.random.split(key)
    inputs = jax.random.normal(k_in, (B, J, C_IN), jnp.float32)
    params = init_params(k_par)

    fused_slab = prepare_params(params)                # one-time param fusion + packing
    fwd = jax.jit(pose_discriminator_forward)
    scores, internal = fwd(inputs, fused_slab)
    jax.block_until_ready((scores, internal))

    ref_scores, ref_internal = reference_forward(inputs, params)
    assert scores.shape == (B, J)
    assert internal.shape == (B, C_HID, 1, J)
    assert jnp.allclose(scores, ref_scores, atol=1e-3, rtol=1e-3)
    assert jnp.allclose(internal, ref_internal, atol=1e-3, rtol=1e-3)

    print("KERNEL_OK")
</pallas_src>

<mosaic_0001>
module attributes {stable_mosaic.version = 11 : i64} {
  func.func @_disc_kernel(%arg0: memref<2x9x23xf32, #tpu.memory_space<vmem>>, %arg1: memref<104x23xf32, #tpu.memory_space<vmem>>, %arg2: memref<2x23xf32, #tpu.memory_space<vmem>>, %arg3: memref<2x32x23xf32, #tpu.memory_space<vmem>>) attributes {dimension_semantics = [], scalar_prefetch = 0 : i64, scratch_operands = 0 : i64, tpu.core_type = #tpu.core_type<tc>} {
    %c0 = arith.constant 0 : index
    %c0_0 = arith.constant 0 : index
    %0 = vector.load %arg1[%c0, %c0_0] : memref<104x23xf32, #tpu.memory_space<vmem>>, vector<32x9xf32>
    %c32 = arith.constant 32 : index
    %c0_1 = arith.constant 0 : index
    %1 = vector.load %arg1[%c32, %c0_1] : memref<104x23xf32, #tpu.memory_space<vmem>>, vector<32x23xf32>
    %c64 = arith.constant 64 : index
    %c0_2 = arith.constant 0 : index
    %2 = vector.load %arg1[%c64, %c0_2] : memref<104x23xf32, #tpu.memory_space<vmem>>, vector<32x23xf32>
    %c96 = arith.constant 96 : index
    %c0_3 = arith.constant 0 : index
    %3 = vector.load %arg1[%c96, %c0_3] : memref<104x23xf32, #tpu.memory_space<vmem>>, vector<1x23xf32>
    %c0_4 = arith.constant 0 : index
    %c0_5 = arith.constant 0 : index
    %c0_6 = arith.constant 0 : index
    %4 = vector.load %arg0[%c0_4, %c0_5, %c0_6] : memref<2x9x23xf32, #tpu.memory_space<vmem>>, vector<1x9x23xf32>
    %5 = vector.shape_cast %4 : vector<1x9x23xf32> to vector<9x23xf32>
    %cst = arith.constant dense<0.000000e+00> : vector<32x23xf32>
    %6 = tpu.matmul %0, %5, %cst {dimension_numbers = #tpu.dot_dimension_numbers<[1], [0], [0], [1], [0, 0, 1, 1], [], []>} : vector<32x9xf32>, vector<9x23xf32>, vector<32x23xf32> -> vector<32x23xf32>
    %7 = arith.addf %6, %1 : vector<32x23xf32>
    %c0_7 = arith.constant 0 : index
    %c0_8 = arith.constant 0 : index
    %c0_9 = arith.constant 0 : index
    %8 = vector.load %arg3[%c0_7, %c0_8, %c0_9] : memref<2x32x23xf32, #tpu.memory_space<vmem>>, vector<1x32x23xf32>
    %9 = vector.shape_cast %8 : vector<1x32x23xf32> to vector<32x23xf32>
    %10 = vector.shape_cast %7 : vector<32x23xf32> to vector<1x32x23xf32>
    tpu.vector_store %arg3[%c0_7, %c0_8, %c0_9], %10 {strides = array<i32>} : memref<2x32x23xf32, #tpu.memory_space<vmem>>, vector<1x32x23xf32>,
    %11 = arith.mulf %7, %2 : vector<32x23xf32>
    %cst_10 = arith.constant dense<0.000000e+00> : vector<23xf32>
    %12 = vector.multi_reduction <add>, %11, %cst_10 [0] : vector<32x23xf32> to vector<23xf32>
    %13 = vector.shape_cast %12 : vector<23xf32> to vector<1x23xf32>
    %c1 = arith.constant 1 : index
    %c0_11 = arith.constant 0 : index
    %c0_12 = arith.constant 0 : index
    %14 = vector.load %arg0[%c1, %c0_11, %c0_12] : memref<2x9x23xf32, #tpu.memory_space<vmem>>, vector<1x9x23xf32>
    %15 = vector.shape_cast %14 : vector<1x9x23xf32> to vector<9x23xf32>
    %cst_13 = arith.constant dense<0.000000e+00> : vector<32x23xf32>
    %16 = tpu.matmul %0, %15, %cst_13 {dimension_numbers = #tpu.dot_dimension_numbers<[1], [0], [0], [1], [0, 0, 1, 1], [], []>} : vector<32x9xf32>, vector<9x23xf32>, vector<32x23xf32> -> vector<32x23xf32>
    %17 = arith.addf %16, %1 : vector<32x23xf32>
    %c1_14 = arith.constant 1 : index
    %c0_15 = arith.constant 0 : index
    %c0_16 = arith.constant 0 : index
    %18 = vector.load %arg3[%c1_14, %c0_15, %c0_16] : memref<2x32x23xf32, #tpu.memory_space<vmem>>, vector<1x32x23xf32>
    %19 = vector.shape_cast %18 : vector<1x32x23xf32> to vector<32x23xf32>
    %20 = vector.shape_cast %17 : vector<32x23xf32> to vector<1x32x23xf32>
    tpu.vector_store %arg3[%c1_14, %c0_15, %c0_16], %20 {strides = array<i32>} : memref<2x32x23xf32, #tpu.memory_space<vmem>>, vector<1x32x23xf32>,
    %21 = arith.mulf %17, %2 : vector<32x23xf32>
    %cst_17 = arith.constant dense<0.000000e+00> : vector<23xf32>
    %22 = vector.multi_reduction <add>, %21, %cst_17 [0] : vector<32x23xf32> to vector<23xf32>
    %23 = vector.shape_cast %22 : vector<23xf32> to vector<1x23xf32>
    %24 = tpu.concatenate %13, %23 in 0 : vector<1x23xf32>, vector<1x23xf32> -> vector<2x23xf32>
    %25 = vector.broadcast %3 : vector<1x23xf32> to vector<2x23xf32>
    %26 = arith.addf %24, %25 : vector<2x23xf32>
    %27 = arith.negf %26 : vector<2x23xf32>
    %28 = math.exp %27 : vector<2x23xf32>
    %cst_18 = arith.constant 1.000000e+00 : f32
    %29 = vector.broadcast %cst_18 : f32 to vector<2x23xf32>
    %30 = arith.addf %29, %28 : vector<2x23xf32>
    %31 = arith.divf %29, %30 : vector<2x23xf32>
    %c0_19 = arith.constant 0 : index
    %c0_20 = arith.constant 0 : index
    %32 = vector.load %arg2[%c0_19, %c0_20] : memref<2x23xf32, #tpu.memory_space<vmem>>, vector<2x23xf32>
    tpu.vector_store %arg2[%c0_19, %c0_20], %31 {strides = array<i32>} : memref<2x23xf32, #tpu.memory_space<vmem>>, vector<2x23xf32>,
    return
  }
}

</mosaic_0001>

<llo_original>
// kernel: pose_discriminator_forward.1
$region0: #{pose_discriminator_forward.1}
  #allocation0 [shape = 'u32[]', space=smem, size = 0x4, offset = 0x4, fixed_abs, tag = 'smem constant byte address 0x4 - core index']
  #allocation1 [shape = 'u32[72,128]{1,0:T(1,128)}', space=vmem, size = 0x9000, scoped, tag = 'internal scratch']
  %s0 = inlined_call_operand.vmem [shape: f32[2,9,23], index: 0, kind: input, shape index: {}]
  %s1 = inlined_call_operand.vmem [shape: f32[104,23], index: 1, kind: input, shape index: {}]
  %s2 = inlined_call_operand.hbm [shape: f32[2,23], index: 2, kind: output, shape index: {0}]
  %s3 = inlined_call_operand.vmem [shape: f32[2,32,23], index: 3, kind: output, shape index: {1}]
  %4 = xla_tuple %s2, %s3
  %s5 = sld [smem:[#allocation0]]
  $region26: #{pose_discriminator_forward.1} parent=0
    _
  %s7 = ssub.s32 1, %s5
  %s8 = scalar_select 0, %s7, %s5
  $region1: #{pose_discriminator_forward.1} parent=0
    #allocation2 [shape = 'u8[1024]{0}', space=vmem, size = 0x400, scoped, tag = 'output window, operand 0, single buffered']
    #allocation3 [shape = 's32[1]{0}', space=sflag, size = 0x4, scoped, tag = 'scoped memory for pose_discriminator_forward.1']
    %9 = vsyncpa [#allocation3], 0
    // Predicated region
    $region2: #{pose_discriminator_forward.1} parent=1 // pred_check
      _
    $region3: #{pose_discriminator_forward.1} parent=1 // pred_check_branch
      %11 = sbr.rel (0) target = $region5
    $region4: #{pose_discriminator_forward.1} parent=1 // pred_region
      _
    $region5: #{pose_discriminator_forward.1} parent=1 // pred_fallthru
      _
    // Predicated region
    $region6: #{pose_discriminator_forward.1} parent=1 // pred_check
      _
    $region7: #{pose_discriminator_forward.1} parent=1 // pred_check_branch
      %13 = sbr.rel (0) target = $region9
    $region8: #{pose_discriminator_forward.1} parent=1 // pred_region
      _
    $region9: #{pose_discriminator_forward.1} parent=1 // pred_fallthru
      _
    %v14 = vld [vmem:[%s1] sm:$0xff]
    %v15 = vld [vmem:[%s1 + $0x8] sm:$0xff]
    %v16 = vld [vmem:[%s1 + $0x10] sm:$0xff]
    %v17 = vld [vmem:[%s1 + $0x18] sm:$0xff]
    %v18 = vld [vmem:[%s1 + $0x20] sm:$0xff]
    %v19 = vld [vmem:[%s1 + $0x28] sm:$0xff]
    %v20 = vld [vmem:[%s1 + $0x30] sm:$0xff]
    %v21 = vld [vmem:[%s1 + $0x38] sm:$0xff]
    %v22 = vld [vmem:[%s1 + $0x40] sm:$0xff]
    %v23 = vld [vmem:[%s1 + $0x48] sm:$0xff]
    %v24 = vld [vmem:[%s1 + $0x50] sm:$0xff]
    %v25 = vld [vmem:[%s1 + $0x58] sm:$0xff]
    %v26 = vld [vmem:[%s1 + $0x60] sm:$0x1]
    %v27 = vld [vmem:[%s0] sm:$0xff]
    %v28 = vld [vmem:[%s0 + $0x8] sm:$0x1]
    %vm29 = vcmask 72704
    %v31 = vsel %vm29, %v14, 0
    %v34 = vsel %vm29, %v15, 0
    %v37 = vsel %vm29, %v16, 0
    %v40 = vsel %vm29, %v17, 0
    %vm42 = vcmask 1040384
    %v44 = vsel %vm42, %v28, 0
    %46 = vmatpush.msra.mxu0 0.0
    %47 = vmatpush.msra.mxu0 0.0
    %48 = vmatpush.msra.mxu0 0.0
    %49 = vmatpush.msra.mxu0 0.0
    %50 = vmatpush.msra.mxu0 0.0
    %51 = vmatpush.msra.mxu0 0.0
    %52 = vmatpush.msra.mxu0 0.0
    %53 = vmatpush.msra.mxu0 0.0
    %54 = vmatpush.msra.mxu0 0.0
    %55 = vmatpush.msra.mxu0 0.0
    %56 = vmatpush.msra.mxu0 0.0
    %57 = vmatpush.msra.mxu0 0.0
    %58 = vmatpush.msra.mxu0 0.0
    %59 = vmatpush.msra.mxu0 0.0
    %60 = vmatpush.msra.mxu0 %v44
    %61 = vmatpush.msra.mxu0 %v27
    %62 = vmatmul.f32.gmra.mxu0 %v31
    %v63 = vpop.f32.mrf.mxu0
    %v64 = vadd.f32 %v18, %v63
    %65 = vmatmul.f32.gmra.mxu0 %v34
    %v66 = vpop.f32.mrf.mxu0
    %v67 = vadd.f32 %v19, %v66
    %68 = vmatmul.f32.gmra.mxu0 %v37
    %v69 = vpop.f32.mrf.mxu0
    %v70 = vadd.f32 %v20, %v69
    %71 = vmatmul.f32.gmra.mxu0 %v40
    %v72 = vpop.f32.mrf.mxu0
    %v73 = vadd.f32 %v21, %v72
    %74 = vdwg.mxu0
    %vm75 = vcmask 187392
    %76 = vst.msk [vmem:[%s3] sm:$0xff] %vm75, %v64
    %77 = vst.msk [vmem:[%s3 + $0x8] sm:$0xff] %vm75, %v67
    %78 = vst.msk [vmem:[%s3 + $0x10] sm:$0xff] %vm75, %v70
    %79 = vst.msk [vmem:[%s3 + $0x18] sm:$0xff] %vm75, %v73
    %v80 = vmul.f32 %v64, %v22
    %v81 = vmul.f32 %v67, %v23
    %v82 = vmul.f32 %v70, %v24
    %v83 = vmul.f32 %v73, %v25
    %v84 = vsel %vm75, %v80, 0.0
    %v85 = vsel %vm75, %v81, 0.0
    %v86 = vadd.f32 %v84, %v85
    %v87 = vsel %vm75, %v82, 0.0
    %v88 = vadd.f32 %v86, %v87
    %v89 = vsel %vm75, %v83, 0.0
    %v90 = vadd.f32 %v88, %v89
    %v91 = vrot.slane %v90, 4
    %v92 = vadd.f32 %v90, %v91
    %v93 = vrot.slane %v92, 2
    %v94 = vadd.f32 %v92, %v93
    %v95 = vrot.slane %v94, 1
    %v96 = vadd.f32 %v94, %v95
    %s97 = scalar_lea.vmem %s0, 16
    %v98 = vld [vmem:[%s97] sm:$0xff]
    %v99 = vld [vmem:[%s97 + $0x8] sm:$0x1]
    %v101 = vsel %vm42, %v99, 0
    %103 = vmatpush.msra.mxu0 0.0
    %104 = vmatpush.msra.mxu0 0.0
    %105 = vmatpush.msra.mxu0 0.0
    %106 = vmatpush.msra.mxu0 0.0
    %107 = vmatpush.msra.mxu0 0.0
    %108 = vmatpush.msra.mxu0 0.0
    %109 = vmatpush.msra.mxu0 0.0
    %110 = vmatpush.msra.mxu0 0.0
    %111 = vmatpush.msra.mxu0 0.0
    %112 = vmatpush.msra.mxu0 0.0
    %113 = vmatpush.msra.mxu0 0.0
    %114 = vmatpush.msra.mxu0 0.0
    %115 = vmatpush.msra.mxu0 0.0
    %116 = vmatpush.msra.mxu0 0.0
    %117 = vmatpush.msra.mxu0 %v101
    %118 = vmatpush.msra.mxu0 %v98
    %119 = vmatmul.f32.gmra.mxu0 %v31
    %v120 = vpop.f32.mrf.mxu0
    %v121 = vadd.f32 %v18, %v120
    %122 = vmatmul.f32.gmra.mxu0 %v34
    %v123 = vpop.f32.mrf.mxu0
    %v124 = vadd.f32 %v19, %v123
    %125 = vmatmul.f32.gmra.mxu0 %v37
    %v126 = vpop.f32.mrf.mxu0
    %v127 = vadd.f32 %v20, %v126
    %128 = vmatmul.f32.gmra.mxu0 %v40
    %v129 = vpop.f32.mrf.mxu0
    %v130 = vadd.f32 %v21, %v129
    %131 = vdwg.mxu0
    %s132 = scalar_lea.vmem %s3, 32
    %133 = vst.msk [vmem:[%s132] sm:$0xff] %vm75, %v121
    %134 = vst.msk [vmem:[%s132 + $0x8] sm:$0xff] %vm75, %v124
    %135 = vst.msk [vmem:[%s132 + $0x10] sm:$0xff] %vm75, %v127
    %136 = vst.msk [vmem:[%s132 + $0x18] sm:$0xff] %vm75, %v130
    %v137 = vmul.f32 %v121, %v22
    %v138 = vmul.f32 %v124, %v23
    %v139 = vmul.f32 %v127, %v24
    %v140 = vmul.f32 %v130, %v25
    %v141 = vsel %vm75, %v137, 0.0
    %v142 = vsel %vm75, %v138, 0.0
    %v143 = vadd.f32 %v141, %v142
    %v144 = vsel %vm75, %v139, 0.0
    %v145 = vadd.f32 %v143, %v144
    %v146 = vsel %vm75, %v140, 0.0
    %v147 = vadd.f32 %v145, %v146
    %v148 = vrot.slane %v147, 4
    %v149 = vadd.f32 %v147, %v148
    %v150 = vrot.slane %v149, 2
    %v151 = vadd.f32 %v149, %v150
    %v152 = vrot.slane %v151, 1
    %v153 = vadd.f32 %v151, %v152
    %v154 = vsel %vm42, %v96, %v153
    %v155 = vperm.slane %v26, 0
    %v156 = vadd.f32 %v154, %v155
    %v157 = vxor.u32 %v156, 2147483648
    %v158 = vmul.f32 %v157, 1.442695
    %v159 = vpow.pop %v158
    %v160 = vadd.f32 %v159, 1.0
    %v161 = vrcp.pop %v160
    %v162 = vmul.f32 %v160, %v161
    %v163 = vsub.f32 1.0, %v162
    %v164 = vmul.f32 %v161, %v163
    %v165 = vadd.f32 %v161, %v164
    %vm166 = vweird.f32 %v160
    %vm167 = vweird.f32 %v161
    %vm168 = vmor %vm166, %vm167
    %v169 = vsel %vm168, %v161, %v165
    %v170 = vand.u32 2147483647, %v160
    %vm171 = vcmp.eq.f32.partialorder %v170, 8.507059e+37
    %v172 = vand.u32 %v160, 2147483648
    %v173 = vor.u32 1.1754944e-38, %v172
    %v174 = vsel %vm171, %v173, %v169
    %v175 = vmul.f32 1.0, %v174
    %vm176 = vcmask 181248
    %177 = vst.msk [vmem:[#allocation2] sm:$0x3] %vm176, %v175
    // Predicated region
    $region10: #{pose_discriminator_forward.1} parent=1 // pred_check
      _
    $region11: #{pose_discriminator_forward.1} parent=1 // pred_check_branch
      %179 = sbr.rel (0) target = $region13
    $region12: #{pose_discriminator_forward.1} parent=1 // pred_region
      %181 = vsyncadd [#allocation3], 0
      %s183 = sshll.u32 [#allocation2], 4
      %s184 = int_to_ptr.vmem [resolvable:$true] %s183
      %s185 = sshll.u32 %s2, 4
      %s186 = int_to_ptr.hbm [resolvable:$true] %s185
      %188 = dma.vmem_to_hbm [thread:$0]  %s184, 32, %s186, [#allocation3]
    $region13: #{pose_discriminator_forward.1} parent=1 // pred_fallthru
      _
    // Predicated region
    $region14: #{pose_discriminator_forward.1} parent=1 // pred_check
      _
    $region15: #{pose_discriminator_forward.1} parent=1 // pred_check_branch
      %190 = sbr.rel (0) target = $region17
    $region16: #{pose_discriminator_forward.1} parent=1 // pred_region
      _
    $region17: #{pose_discriminator_forward.1} parent=1 // pred_fallthru
      _
    // Predicated region
    $region18: #{pose_discriminator_forward.1} parent=1 // pred_check
      _
    $region19: #{pose_discriminator_forward.1} parent=1 // pred_check_branch
      %192 = sbr.rel (0) target = $region21
    $region20: #{pose_discriminator_forward.1} parent=1 // pred_region
      %194 = dma.done [#allocation3], 32
    $region21: #{pose_discriminator_forward.1} parent=1 // pred_fallthru
      _
    // Predicated region
    $region22: #{pose_discriminator_forward.1} parent=1 // pred_check
      _
    $region23: #{pose_discriminator_forward.1} parent=1 // pred_check_branch
      %196 = sbr.rel (0) target = $region25
    $region24: #{pose_discriminator_forward.1} parent=1 // pred_region
      _
    $region25: #{pose_discriminator_forward.1} parent=1 // pred_fallthru
      _
    %197 = vsyncpa [#allocation3], 1

</llo_original>
